<compile_context>
chip_gen: v7x
topology: tpu7x:2x2x1
jax: 0.10.0
libtpu: 0.0.40
codegen_flags: <defaults>
</compile_context>

<pallas_src>
import numpy as np
import jax
import jax.numpy as jnp
from jax import lax
from jax.experimental import pallas as pl
from jax.experimental.pallas import tpu as pltpu

# ---- "config" (mirrors the attributes the torch module reads) ----------------
N_FFT = 128
WIN_LENGTH = 128
HOP_LENGTH = 32
N_FREQ = N_FFT // 2                 # output bins 1..64 (DC dropped, Nyquist kept)
ROW = 2 * HOP_LENGTH                # 64 samples per waveform row (2 hops)


def _dft_basis_bf16():
    """Windowed one-sided DFT basis, cos|sin fused: (n_fft, 2*n_freq) = (128, 128).

    Window = periodic Hann (torch.hann_window).  The reference effectively uses
    win_length * hann; that constant cancels in the final z-norm and is dropped.
    """
    n = np.arange(N_FFT, dtype=np.float64)
    win = 0.5 * (1.0 - np.cos(2.0 * np.pi * n / WIN_LENGTH))
    k = np.arange(1, N_FREQ + 1, dtype=np.float64)
    ang = 2.0 * np.pi * np.outer(n, k) / N_FFT
    basis = np.concatenate([win[:, None] * np.cos(ang),
                            win[:, None] * np.sin(ang)], axis=1)       # (128, 128)
    return jnp.asarray(basis, dtype=jnp.bfloat16)


def _make_kernel(f, f2, half_tiles, n_frames):
    """One kernel per tile of `f` frames (f2 = f // 2 packed output rows)."""

    def kernel(h_ref, hnext_ref, basis_ref, pow_ref, sum_ref, sumsq_ref):
        i = pl.program_id(1)

        @pl.when(i == 0)
        def _():
            sum_ref[...] = jnp.zeros_like(sum_ref)
            sumsq_ref[...] = jnp.zeros_like(sumsq_ref)

        # Waveform rows [tile*f2, tile*f2 + f2 + 8), 64 samples each.
        ext = jnp.concatenate([h_ref[...], hnext_ref[...]], axis=0)     # (f2+8, 64) f32

        # Frame 2j   : rows j , j+1                      (128 consecutive samples)
        # Frame 2j+1 : row j[32:] , row j+1 , row j+2[:32]
        fe = jnp.concatenate(
            [ext[0:f2, :], ext[1:f2 + 1, :]], axis=1).astype(jnp.bfloat16)         # (f2,128)
        fo = jnp.concatenate(
            [ext[0:f2, HOP_LENGTH:], ext[1:f2 + 1, :], ext[2:f2 + 2, :HOP_LENGTH]],
            axis=1).astype(jnp.bfloat16)                                            # (f2,128)

        b = basis_ref[...]                                                          # bf16
        ye = jnp.dot(fe, b, preferred_element_type=jnp.float32)         # (f2,128) cos|sin
        yo = jnp.dot(fo, b, preferred_element_type=jnp.float32)

        se = ye * ye
        pe = se + pltpu.roll(se, shift=N_FREQ, axis=1)                  # Re^2+Im^2 (dup halves)
        so = yo * yo
        po = so + pltpu.roll(so, shift=N_FREQ, axis=1)

        # Lane-dense pack: row j = [bins of frame 2j | bins of frame 2j+1].
        lane = lax.broadcasted_iota(jnp.int32, (f2, N_FFT), 1)
        packed = jnp.where(lane < N_FREQ, pe, po)
        pow_ref[...] = packed

        # Masked per-lane stats partials (resident across the "arbitrary" axis).
        tile = pl.program_id(0) * half_tiles + i
        row = lax.broadcasted_iota(jnp.int32, (f2, N_FFT), 0)
        fid = tile * f + 2 * row + jnp.where(lane >= N_FREQ, 1, 0)
        masked = jnp.where(fid < n_frames, packed, 0.0)
        sum_ref[0:1, :] = sum_ref[0:1, :] + jnp.sum(masked, axis=0, keepdims=True)
        sumsq_ref[0:1, :] = sumsq_ref[0:1, :] + jnp.sum(masked * masked, axis=0,
                                                        keepdims=True)

    return kernel


def transform_wave(x):
    """JAX/Pallas equivalent of the PyTorch `transform_wave` forward pass."""
    x = x.astype(jnp.float32)
    t = x.shape[0]
    pad = N_FFT // 2
    n_frames = 1 + t // HOP_LENGTH
    n_total = n_frames * N_FREQ

    # ---- frame tiling (frames per tile: multiple of 16 so packed rows are /8) ----
    f = min(4096, -(-n_frames // 16) * 16)
    f2 = f // 2
    n_tiles = pl.cdiv(n_frames, f)
    half_tiles = pl.cdiv(n_tiles, 2)          # per-core tile count (v7x megacore split)
    n_tiles_p = 2 * half_tiles
    n_rows = n_tiles_p * f2 + 8               # 64-sample rows (+1 extra block for "next")

    # ---- center (reflect) pad + zero tail, single concatenate ---------------------
    left = x[1:pad + 1][::-1]
    right = x[-(pad + 1):-1][::-1]
    tail = jnp.zeros((n_rows * ROW - (t + 2 * pad),), jnp.float32)
    h = jnp.concatenate([left, x, right, tail]).reshape(n_rows, ROW)

    basis = _dft_basis_bf16()                                          # (128, 128) bf16

    h_spec = pl.BlockSpec((f2, ROW), lambda c, i: (c * half_tiles + i, 0))
    hnext_spec = pl.BlockSpec((8, ROW),
                              lambda c, i: ((c * half_tiles + i + 1) * (f2 // 8), 0))
    basis_spec = pl.BlockSpec((N_FFT, N_FFT), lambda c, i: (0, 0))

    power, acc_sum, acc_sq = pl.pallas_call(
        _make_kernel(f, f2, half_tiles, n_frames),
        out_shape=(jax.ShapeDtypeStruct((n_tiles_p * f2, N_FFT), jnp.float32),   # packed power
                   jax.ShapeDtypeStruct((2 * 8, N_FFT), jnp.float32),            # sum partials
                   jax.ShapeDtypeStruct((2 * 8, N_FFT), jnp.float32)),           # sumsq partials
        grid=(2, half_tiles),
        in_specs=[h_spec, hnext_spec, basis_spec],
        out_specs=[pl.BlockSpec((f2, N_FFT), lambda c, i: (c * half_tiles + i, 0)),
                   pl.BlockSpec((8, N_FFT), lambda c, i: (c, 0)),
                   pl.BlockSpec((8, N_FFT), lambda c, i: (c, 0))],
        compiler_params=pltpu.CompilerParams(
            dimension_semantics=("parallel", "arbitrary"),
            vmem_limit_bytes=32 * 1024 * 1024),
    )(h, h, basis)

    # ---- tiny XLA epilogue: mean / inv-std (unbiased) + fused elementwise z-norm --
    s = jnp.sum(acc_sum)
    q = jnp.sum(acc_sq)
    mean = s / n_total
    var = jnp.maximum(q - s * mean, 0.0) / (n_total - 1)
    inv_std = lax.rsqrt(var)                  # NaN/inf for constant input, same as torch

    spec = power.reshape(n_tiles_p * f, N_FREQ)[:n_frames]   # row-major unpack (free)
    return (spec - mean) * inv_std


if __name__ == "__main__":
    key = jax.random.PRNGKey(0)
    T = 1024                                        # small waveform
    x = jax.random.normal(key, (T,), dtype=jnp.float32)
    y = jax.jit(transform_wave)(x)                  # (33, 64) == (n_frames, n_fft // 2)
    jax.block_until_ready(y)
    assert y.shape == (1 + T // HOP_LENGTH, N_FREQ)
    print("KERNEL_OK")
</pallas_src>

<mosaic_0001>
module attributes {stable_mosaic.version = 11 : i64} {
  func.func @kernel(%arg0: i32, %arg1: i32, %arg2: memref<24x64xf32, #tpu.memory_space<vmem>>, %arg3: memref<8x64xf32, #tpu.memory_space<vmem>>, %arg4: memref<128x128xbf16, #tpu.memory_space<vmem>>, %arg5: memref<24x128xf32, #tpu.memory_space<vmem>>, %arg6: memref<8x128xf32, #tpu.memory_space<vmem>>, %arg7: memref<8x128xf32, #tpu.memory_space<vmem>>) attributes {dimension_semantics = [#tpu.dimension_semantics<parallel>, #tpu.dimension_semantics<arbitrary>], iteration_bounds = array<i64: 2, 1>, scalar_prefetch = 0 : i64, scratch_operands = 0 : i64, tpu.core_type = #tpu.core_type<tc>, window_params = [{transform_indices = @transform_0, window_bounds = array<i64: 24, 64>}, {transform_indices = @transform_1, window_bounds = array<i64: 8, 64>}, {pipeline_mode = #tpu.pipeline_mode<synchronous>, transform_indices = @transform_2, window_bounds = array<i64: 128, 128>}, {transform_indices = @transform_3, window_bounds = array<i64: 24, 128>}, {transform_indices = @transform_4, window_bounds = array<i64: 8, 128>}, {transform_indices = @transform_5, window_bounds = array<i64: 8, 128>}]} {
    %c0_i32 = arith.constant 0 : i32
    %0 = arith.cmpi eq, %arg1, %c0_i32 : i32
    %1 = arith.extui %0 : i1 to i32
    %c0_i32_0 = arith.constant 0 : i32
    %2 = arith.cmpi ne, %1, %c0_i32_0 : i32
    scf.if %2 {
      %cst_25 = arith.constant 0.000000e+00 : f32
      %58 = vector.broadcast %cst_25 : f32 to vector<8x128xf32>
      %c0_26 = arith.constant 0 : index
      %c0_27 = arith.constant 0 : index
      %59 = vector.load %arg6[%c0_26, %c0_27] : memref<8x128xf32, #tpu.memory_space<vmem>>, vector<8x128xf32>
      tpu.vector_store %arg6[%c0_26, %c0_27], %58 {strides = array<i32>} : memref<8x128xf32, #tpu.memory_space<vmem>>, vector<8x128xf32>,
      %cst_28 = arith.constant 0.000000e+00 : f32
      %60 = vector.broadcast %cst_28 : f32 to vector<8x128xf32>
      %c0_29 = arith.constant 0 : index
      %c0_30 = arith.constant 0 : index
      %61 = vector.load %arg7[%c0_29, %c0_30] : memref<8x128xf32, #tpu.memory_space<vmem>>, vector<8x128xf32>
      tpu.vector_store %arg7[%c0_29, %c0_30], %60 {strides = array<i32>} : memref<8x128xf32, #tpu.memory_space<vmem>>, vector<8x128xf32>,
    } else {
    }
    %c0 = arith.constant 0 : index
    %c0_1 = arith.constant 0 : index
    %3 = vector.load %arg2[%c0, %c0_1] : memref<24x64xf32, #tpu.memory_space<vmem>>, vector<24x64xf32>
    %c0_2 = arith.constant 0 : index
    %c0_3 = arith.constant 0 : index
    %4 = vector.load %arg3[%c0_2, %c0_3] : memref<8x64xf32, #tpu.memory_space<vmem>>, vector<8x64xf32>
    %5 = tpu.concatenate %3, %4 in 0 : vector<24x64xf32>, vector<8x64xf32> -> vector<32x64xf32>
    %6 = vector.extract_strided_slice %5 {offsets = [0, 0], sizes = [24, 64], strides = [1, 1]} : vector<32x64xf32> to vector<24x64xf32>
    %7 = vector.extract_strided_slice %5 {offsets = [1, 0], sizes = [24, 64], strides = [1, 1]} : vector<32x64xf32> to vector<24x64xf32>
    %8 = tpu.concatenate %6, %7 in 1 : vector<24x64xf32>, vector<24x64xf32> -> vector<24x128xf32>
    %9 = arith.truncf %8 : vector<24x128xf32> to vector<24x128xbf16>
    %10 = vector.extract_strided_slice %5 {offsets = [0, 32], sizes = [24, 32], strides = [1, 1]} : vector<32x64xf32> to vector<24x32xf32>
    %11 = vector.extract_strided_slice %5 {offsets = [1, 0], sizes = [24, 64], strides = [1, 1]} : vector<32x64xf32> to vector<24x64xf32>
    %12 = vector.extract_strided_slice %5 {offsets = [2, 0], sizes = [24, 32], strides = [1, 1]} : vector<32x64xf32> to vector<24x32xf32>
    %13 = tpu.concatenate %10, %11, %12 in 1 : vector<24x32xf32>, vector<24x64xf32>, vector<24x32xf32> -> vector<24x128xf32>
    %14 = arith.truncf %13 : vector<24x128xf32> to vector<24x128xbf16>
    %c0_4 = arith.constant 0 : index
    %c0_5 = arith.constant 0 : index
    %15 = vector.load %arg4[%c0_4, %c0_5] : memref<128x128xbf16, #tpu.memory_space<vmem>>, vector<128x128xbf16>
    %cst = arith.constant dense<0.000000e+00> : vector<24x128xf32>
    %16 = tpu.matmul %9, %15, %cst {dimension_numbers = #tpu.dot_dimension_numbers<[1], [0], [0], [1], [0, 0, 1, 1], [], []>} : vector<24x128xbf16>, vector<128x128xbf16>, vector<24x128xf32> -> vector<24x128xf32>
    %cst_6 = arith.constant dense<0.000000e+00> : vector<24x128xf32>
    %17 = tpu.matmul %14, %15, %cst_6 {dimension_numbers = #tpu.dot_dimension_numbers<[1], [0], [0], [1], [0, 0, 1, 1], [], []>} : vector<24x128xbf16>, vector<128x128xbf16>, vector<24x128xf32> -> vector<24x128xf32>
    %18 = arith.mulf %16, %16 : vector<24x128xf32>
    %c64_i32 = arith.constant 64 : i32
    %19 = tpu.dynamic_rotate %18 by %c64_i32 dim 1 : vector<24x128xf32>, i32 -> vector<24x128xf32>
    %20 = arith.addf %18, %19 : vector<24x128xf32>
    %21 = arith.mulf %17, %17 : vector<24x128xf32>
    %c64_i32_7 = arith.constant 64 : i32
    %22 = tpu.dynamic_rotate %21 by %c64_i32_7 dim 1 : vector<24x128xf32>, i32 -> vector<24x128xf32>
    %23 = arith.addf %21, %22 : vector<24x128xf32>
    %24 = tpu.iota {dimensions = array<i32: 1>} : vector<24x128xi32>
    %c64_i32_8 = arith.constant 64 : i32
    %25 = vector.broadcast %c64_i32_8 : i32 to vector<24x128xi32>
    %26 = arith.cmpi slt, %24, %25 : vector<24x128xi32>
    %27 = arith.select %26, %20, %23 : vector<24x128xi1>, vector<24x128xf32>
    %c0_9 = arith.constant 0 : index
    %c0_10 = arith.constant 0 : index
    %28 = vector.load %arg5[%c0_9, %c0_10] : memref<24x128xf32, #tpu.memory_space<vmem>>, vector<24x128xf32>
    tpu.vector_store %arg5[%c0_9, %c0_10], %27 {strides = array<i32>} : memref<24x128xf32, #tpu.memory_space<vmem>>, vector<24x128xf32>,
    %c1_i32 = arith.constant 1 : i32
    %29 = arith.muli %arg0, %c1_i32 : i32
    %30 = arith.addi %29, %arg1 : i32
    %31 = tpu.iota {dimensions = array<i32: 0>} : vector<24x128xi32>
    %c48_i32 = arith.constant 48 : i32
    %32 = arith.muli %30, %c48_i32 : i32
    %c2_i32 = arith.constant 2 : i32
    %33 = vector.broadcast %c2_i32 : i32 to vector<24x128xi32>
    %34 = arith.muli %33, %31 : vector<24x128xi32>
    %35 = vector.broadcast %32 : i32 to vector<24x128xi32>
    %36 = arith.addi %35, %34 : vector<24x128xi32>
    %c64_i32_11 = arith.constant 64 : i32
    %37 = vector.broadcast %c64_i32_11 : i32 to vector<24x128xi32>
    %38 = arith.cmpi sge, %24, %37 : vector<24x128xi32>
    %c1_i32_12 = arith.constant 1 : i32
    %c0_i32_13 = arith.constant 0 : i32
    %39 = vector.broadcast %c1_i32_12 : i32 to vector<24x128xi32>
    %40 = vector.broadcast %c0_i32_13 : i32 to vector<24x128xi32>
    %41 = arith.select %38, %39, %40 : vector<24x128xi1>, vector<24x128xi32>
    %42 = arith.addi %36, %41 : vector<24x128xi32>
    %c33_i32 = arith.constant 33 : i32
    %43 = vector.broadcast %c33_i32 : i32 to vector<24x128xi32>
    %44 = arith.cmpi slt, %42, %43 : vector<24x128xi32>
    %cst_14 = arith.constant 0.000000e+00 : f32
    %45 = vector.broadcast %cst_14 : f32 to vector<24x128xf32>
    %46 = arith.select %44, %27, %45 : vector<24x128xi1>, vector<24x128xf32>
    %c0_15 = arith.constant 0 : index
    %c0_16 = arith.constant 0 : index
    %47 = vector.load %arg6[%c0_15, %c0_16] : memref<8x128xf32, #tpu.memory_space<vmem>>, vector<1x128xf32>
    %cst_17 = arith.constant dense<0.000000e+00> : vector<128xf32>
    %48 = vector.multi_reduction <add>, %46, %cst_17 [0] : vector<24x128xf32> to vector<128xf32>
    %49 = vector.shape_cast %48 : vector<128xf32> to vector<1x128xf32>
    %50 = arith.addf %47, %49 : vector<1x128xf32>
    %c0_18 = arith.constant 0 : index
    %c0_19 = arith.constant 0 : index
    %51 = vector.load %arg6[%c0_18, %c0_19] : memref<8x128xf32, #tpu.memory_space<vmem>>, vector<1x128xf32>
    tpu.vector_store %arg6[%c0_18, %c0_19], %50 {strides = array<i32>} : memref<8x128xf32, #tpu.memory_space<vmem>>, vector<1x128xf32>,
    %c0_20 = arith.constant 0 : index
    %c0_21 = arith.constant 0 : index
    %52 = vector.load %arg7[%c0_20, %c0_21] : memref<8x128xf32, #tpu.memory_space<vmem>>, vector<1x128xf32>
    %53 = arith.mulf %46, %46 : vector<24x128xf32>
    %cst_22 = arith.constant dense<0.000000e+00> : vector<128xf32>
    %54 = vector.multi_reduction <add>, %53, %cst_22 [0] : vector<24x128xf32> to vector<128xf32>
    %55 = vector.shape_cast %54 : vector<128xf32> to vector<1x128xf32>
    %56 = arith.addf %52, %55 : vector<1x128xf32>
    %c0_23 = arith.constant 0 : index
    %c0_24 = arith.constant 0 : index
    %57 = vector.load %arg7[%c0_23, %c0_24] : memref<8x128xf32, #tpu.memory_space<vmem>>, vector<1x128xf32>
    tpu.vector_store %arg7[%c0_23, %c0_24], %56 {strides = array<i32>} : memref<8x128xf32, #tpu.memory_space<vmem>>, vector<1x128xf32>,
    return
  }
  func.func @transform_0(%arg0: i32, %arg1: i32) -> (i32, i32) {
    %c1_i32 = arith.constant 1 : i32
    %0 = arith.muli %arg0, %c1_i32 : i32
    %1 = arith.addi %0, %arg1 : i32
    %c0_i32 = arith.constant 0 : i32
    %c0_i32_0 = arith.constant 0 : i32
    return %1, %c0_i32 : i32, i32
  }
  func.func @transform_1(%arg0: i32, %arg1: i32) -> (i32, i32) {
    %c1_i32 = arith.constant 1 : i32
    %0 = arith.muli %arg0, %c1_i32 : i32
    %1 = arith.addi %0, %arg1 : i32
    %c1_i32_0 = arith.constant 1 : i32
    %2 = arith.addi %1, %c1_i32_0 : i32
    %c3_i32 = arith.constant 3 : i32
    %3 = arith.muli %2, %c3_i32 : i32
    %c0_i32 = arith.constant 0 : i32
    %c0_i32_1 = arith.constant 0 : i32
    return %3, %c0_i32 : i32, i32
  }
  func.func @transform_2(%arg0: i32, %arg1: i32) -> (i32, i32) {
    %c0_i32 = arith.constant 0 : i32
    %c0_i32_0 = arith.constant 0 : i32
    %c0_i32_1 = arith.constant 0 : i32
    return %c0_i32, %c0_i32_0 : i32, i32
  }
  func.func @transform_3(%arg0: i32, %arg1: i32) -> (i32, i32) {
    %c1_i32 = arith.constant 1 : i32
    %0 = arith.muli %arg0, %c1_i32 : i32
    %1 = arith.addi %0, %arg1 : i32
    %c0_i32 = arith.constant 0 : i32
    %c0_i32_0 = arith.constant 0 : i32
    return %1, %c0_i32 : i32, i32
  }
  func.func @transform_4(%arg0: i32, %arg1: i32) -> (i32, i32) {
    %c0_i32 = arith.constant 0 : i32
    %c0_i32_0 = arith.constant 0 : i32
    return %arg0, %c0_i32 : i32, i32
  }
  func.func @transform_5(%arg0: i32, %arg1: i32) -> (i32, i32) {
    %c0_i32 = arith.constant 0 : i32
    %c0_i32_0 = arith.constant 0 : i32
    return %arg0, %c0_i32 : i32, i32
  }
}

</mosaic_0001>

<llo_original>
// kernel: transform_wave.1
$region0: #{transform_wave.1}
  #allocation0 [shape = 'u32[]', space=smem, size = 0x4, offset = 0x4, fixed_abs, tag = 'smem constant byte address 0x4 - core index']
  #allocation1 [shape = 'u32[144,128]{1,0:T(1,128)}', space=vmem, size = 0x12000, scoped, tag = 'internal scratch']
  %s0 = inlined_call_operand.vmem [shape: f32[56,64], index: 0, kind: input, shape index: {}, may-alias: {0,1}]
  %s1 = inlined_call_operand.vmem [shape: f32[56,64], index: 1, kind: input, shape index: {}, may-alias: {0,1}]
  %s2 = inlined_call_operand.vmem [shape: bf16[128,128], index: 2, kind: input, shape index: {}]
  %s3 = inlined_call_operand.vmem [shape: f32[48,128], index: 3, kind: output, shape index: {0}]
  %s4 = inlined_call_operand.vmem [shape: f32[16,128], index: 4, kind: output, shape index: {1}]
  %s5 = inlined_call_operand.vmem [shape: f32[16,128], index: 5, kind: output, shape index: {2}]
  %6 = xla_tuple %s3, %s4, %s5
  %s7 = sld [smem:[#allocation0]]
  $region65: #{transform_wave.1} parent=0
    _
  %s9 = ssub.s32 1, %s7
  %s10 = scalar_select 0, %s9, %s7
  loop: start=0, step=1, limit=4
  $region2: #{transform_wave.1} parent=0 // loop_pre_header
    _
  $region3: #{transform_wave.1} parent=0 // loop_header
    %s12 = sphi 0, %s16
    %p13 = scmp.ge.s32.totalorder %s12, 4
    %s19 = sphi 0, %s31
    %s20 = sphi 0, %s27
    %s21 = sphi 0, %s19
    %s22 = sphi 0, %s20
    %s23 = sphi 0, %s21
    %s24 = sphi 0, %s22
    %s36 = sphi 0, %s38
    %s39 = sphi 0, %s36
    %s40 = sphi 0, %s39
    %s56 = sphi 0, %s40
    %s68 = sphi 0, %s70
    %s71 = sphi 0, %s68
    %s72 = sphi 0, %s71
    %s88 = sphi 0, %s72
    %s92 = sphi 0, %s92
    %s94 = sphi 0, %s92
    %s95 = sphi 0, %s94
    %s109 = sphi 0, %s95
    %s117 = sphi 0, %s119
    %s120 = sphi 0, %s117
    %s121 = sphi 0, %s120
    %s137 = sphi 0, %s121
    %s143 = sphi 0, %s145
    %s146 = sphi 0, %s143
    %s147 = sphi 0, %s146
    %s163 = sphi 0, %s147
    %s169 = sphi 0, %s171
    %s172 = sphi 0, %s169
    %s173 = sphi 0, %s172
    %s189 = sphi 0, %s173
  $region4: #{transform_wave.1} parent=0 // loop_header_branch
    %15 = sbr.rel (%p13) target = $region8
  $region5: #{transform_wave.1} parent=0 // loop_body
    %s17 = ssub.s32 %s12, 1
    %s18 = ssub.s32 %s12, 2
    %s25 = sadd.s32 1, %s20
    %p26 = scmp.ge.s32.totalorder %s25, 1
    %s27 = scalar_select %p26, 0, %s25
    %s28 = sadd.s32 1, %s19
    %s29 = scalar_select %p26, %s28, %s19
    %p30 = scmp.ge.s32.totalorder %s29, 2
    %s31 = scalar_select %p30, 0, %s29
    %s32 = sadd.s32 %s19, %s20
    %s33 = sadd.s32 %s31, %s27
    %s34 = ssub.s32 %s32, %s33
    %p35 = scmp.eq.s32.totalorder %s34, 0
    %s37 = sadd.s32 %s36, 1
    %s38 = scalar_select %p35, %s36, %s37
    %p41 = pneg %p35
    %p42 = scmp.eq.s32.totalorder %s12, 1
    %p43 = por %p41, %p42
    %p44 = scmp.ne.s32.totalorder %s36, %s39
    %p45 = scmp.eq.s32.totalorder %s12, 0
    %p46 = por %p44, %p45
    %p47 = scmp.ne.s32.totalorder %s36, %s39
    %p48 = scmp.eq.s32.totalorder %s17, 1
    %p49 = por %p47, %p48
    %p50 = scmp.ne.s32.totalorder %s39, %s40
    %p51 = scmp.eq.s32.totalorder %s17, 0
    %p52 = por %p50, %p51
    %p53 = scmp.ne.s32.totalorder %s39, %s40
    %p54 = scmp.eq.s32.totalorder %s18, 1
    %p55 = por %p53, %p54
    %p57 = scmp.ne.s32.totalorder %s40, %s56
    %p58 = scmp.eq.s32.totalorder %s18, 0
    %p59 = por %p57, %p58
    %s60 = sadd.s32 %s19, %s20
    %s61 = sadd.s32 %s60, 1
    %s62 = smul.u32 %s61, 3
    %s63 = sadd.s32 %s31, %s27
    %s64 = sadd.s32 %s63, 1
    %s65 = smul.u32 %s64, 3
    %s66 = ssub.s32 %s62, %s65
    %p67 = scmp.eq.s32.totalorder %s66, 0
    %s69 = sadd.s32 %s68, 1
    %s70 = scalar_select %p67, %s68, %s69
    %p73 = pneg %p67
    %p74 = scmp.eq.s32.totalorder %s12, 1
    %p75 = por %p73, %p74
    %p76 = scmp.ne.s32.totalorder %s68, %s71
    %p77 = scmp.eq.s32.totalorder %s12, 0
    %p78 = por %p76, %p77
    %p79 = scmp.ne.s32.totalorder %s68, %s71
    %p80 = scmp.eq.s32.totalorder %s17, 1
    %p81 = por %p79, %p80
    %p82 = scmp.ne.s32.totalorder %s71, %s72
    %p83 = scmp.eq.s32.totalorder %s17, 0
    %p84 = por %p82, %p83
    %p85 = scmp.ne.s32.totalorder %s71, %s72
    %p86 = scmp.eq.s32.totalorder %s18, 1
    %p87 = por %p85, %p86
    %p89 = scmp.ne.s32.totalorder %s72, %s88
    %p90 = scmp.eq.s32.totalorder %s18, 0
    %p91 = por %p89, %p90
    %s93 = sadd.s32 %s92, 1
    %p96 = scmp.eq.s32.totalorder %s12, 1
    %p97 = scmp.ne.s32.totalorder %s92, %s94
    %p98 = scmp.eq.s32.totalorder %s12, 0
    %p99 = por %p97, %p98
    %p100 = scmp.ne.s32.totalorder %s92, %s94
    %p101 = scmp.eq.s32.totalorder %s17, 1
    %p102 = por %p100, %p101
    %p103 = scmp.ne.s32.totalorder %s94, %s95
    %p104 = scmp.eq.s32.totalorder %s17, 0
    %p105 = por %p103, %p104
    %p106 = scmp.ne.s32.totalorder %s94, %s95
    %p107 = scmp.eq.s32.totalorder %s18, 1
    %p108 = por %p106, %p107
    %p110 = scmp.ne.s32.totalorder %s95, %s109
    %p111 = scmp.eq.s32.totalorder %s18, 0
    %p112 = por %p110, %p111
    %s113 = sadd.s32 %s19, %s20
    %s114 = sadd.s32 %s31, %s27
    %s115 = ssub.s32 %s113, %s114
    %p116 = scmp.eq.s32.totalorder %s115, 0
    %s118 = sadd.s32 %s117, 1
    %s119 = scalar_select %p116, %s117, %s118
    %p122 = pneg %p116
    %p123 = scmp.eq.s32.totalorder %s12, 1
    %p124 = por %p122, %p123
    %p125 = scmp.ne.s32.totalorder %s117, %s120
    %p126 = scmp.eq.s32.totalorder %s12, 0
    %p127 = por %p125, %p126
    %p128 = scmp.ne.s32.totalorder %s117, %s120
    %p129 = scmp.eq.s32.totalorder %s17, 1
    %p130 = por %p128, %p129
    %p131 = scmp.ne.s32.totalorder %s120, %s121
    %p132 = scmp.eq.s32.totalorder %s17, 0
    %p133 = por %p131, %p132
    %p134 = scmp.ne.s32.totalorder %s120, %s121
    %p135 = scmp.eq.s32.totalorder %s18, 1
    %p136 = por %p134, %p135
    %p138 = scmp.ne.s32.totalorder %s121, %s137
    %p139 = scmp.eq.s32.totalorder %s18, 0
    %p140 = por %p138, %p139
    %s141 = ssub.s32 %s19, %s31
    %p142 = scmp.eq.s32.totalorder %s141, 0
    %s144 = sadd.s32 %s143, 1
    %s145 = scalar_select %p142, %s143, %s144
    %p148 = pneg %p142
    %p149 = scmp.eq.s32.totalorder %s12, 1
    %p150 = por %p148, %p149
    %p151 = scmp.ne.s32.totalorder %s143, %s146
    %p152 = scmp.eq.s32.totalorder %s12, 0
    %p153 = por %p151, %p152
    %p154 = scmp.ne.s32.totalorder %s143, %s146
    %p155 = scmp.eq.s32.totalorder %s17, 1
    %p156 = por %p154, %p155
    %p157 = scmp.ne.s32.totalorder %s146, %s147
    %p158 = scmp.eq.s32.totalorder %s17, 0
    %p159 = por %p157, %p158
    %p160 = scmp.ne.s32.totalorder %s146, %s147
    %p161 = scmp.eq.s32.totalorder %s18, 1
    %p162 = por %p160, %p161
    %p164 = scmp.ne.s32.totalorder %s147, %s163
    %p165 = scmp.eq.s32.totalorder %s18, 0
    %p166 = por %p164, %p165
    %s167 = ssub.s32 %s19, %s31
    %p168 = scmp.eq.s32.totalorder %s167, 0
    %s170 = sadd.s32 %s169, 1
    %s171 = scalar_select %p168, %s169, %s170
    %p174 = pneg %p168
    %p175 = scmp.eq.s32.totalorder %s12, 1
    %p176 = por %p174, %p175
    %p177 = scmp.ne.s32.totalorder %s169, %s172
    %p178 = scmp.eq.s32.totalorder %s12, 0
    %p179 = por %p177, %p178
    %p180 = scmp.ne.s32.totalorder %s169, %s172
    %p181 = scmp.eq.s32.totalorder %s17, 1
    %p182 = por %p180, %p181
    %p183 = scmp.ne.s32.totalorder %s172, %s173
    %p184 = scmp.eq.s32.totalorder %s17, 0
    %p185 = por %p183, %p184
    %p186 = scmp.ne.s32.totalorder %s172, %s173
    %p187 = scmp.eq.s32.totalorder %s18, 1
    %p188 = por %p186, %p187
    %p190 = scmp.ne.s32.totalorder %s173, %s189
    %p191 = scmp.eq.s32.totalorder %s18, 0
    %p192 = por %p190, %p191
    %p193 = scmp.le.s32.totalorder 1, %s12
    %p194 = scmp.lt.s32.totalorder %s12, 3
    %p195 = pnand %p193, %p194
    %p196 = pneg %p195
    // Predicated region
    $region9: #{transform_wave.1} parent=5 // pred_check
      _
    $region10: #{transform_wave.1} parent=5 // pred_check_branch
      %198 = sbr.rel (%p195) target = $region12
    $region11: #{transform_wave.1} parent=5 // pred_region
      %s199 = ssub.s32 %s12, 1
      // Predicated region
      $region13: #{transform_wave.1} parent=11 // pred_check
        %p200 = pneg %p105
      $region14: #{transform_wave.1} parent=11 // pred_check_branch
        %202 = sbr.rel (%p200) target = $region16
      $region15: #{transform_wave.1} parent=11 // pred_region
        _
      $region16: #{transform_wave.1} parent=11 // pred_fallthru
        _
    $region12: #{transform_wave.1} parent=5 // pred_fallthru
      _
    %p203 = scmp.lt.s32.totalorder %s12, 2
    // Predicated region
    $region17: #{transform_wave.1} parent=5 // pred_check
      %p204 = pneg %p203
    $region18: #{transform_wave.1} parent=5 // pred_check_branch
      %206 = sbr.rel (%p204) target = $region20
    $region19: #{transform_wave.1} parent=5 // pred_region
      // Predicated region
      $region21: #{transform_wave.1} parent=19 // pred_check
        %p207 = pneg %p46
      $region22: #{transform_wave.1} parent=19 // pred_check_branch
        %209 = sbr.rel (%p207) target = $region24
      $region23: #{transform_wave.1} parent=19 // pred_region
        %s210 = sadd.s32 %s19, %s20
        %s211 = smul.u32 3, %s210
        %s212 = ssub.s32 7, %s211
        %p213 = scmp.lt.s32.totalorder %s212, 3
        %s214 = scalar_select %p213, %s212, 3
        %s215 = smul.u32 128, %s214
        %p216 = scmp.lt.s32.totalorder %s211, 6
        %s217 = scalar_select %p216, %s211, 6
        %s218 = smul.addr %s217, 8
        %s219 = scalar_lea.vmem %s0, %s218
        %s220 = sadd.s32 %s19, %s20
        %s221 = smul.u32 3, %s220
        %s222 = ssub.s32 7, %s221
        %p223 = scmp.lt.s32.totalorder %s222, 3
        %s224 = scalar_select %p223, %s222, 3
        %s225 = smul.u32 128, %s224
      $region24: #{transform_wave.1} parent=19 // pred_fallthru
        _
      // Predicated region
      $region25: #{transform_wave.1} parent=19 // pred_check
        %p226 = pneg %p78
      $region26: #{transform_wave.1} parent=19 // pred_check_branch
        %228 = sbr.rel (%p226) target = $region28
      $region27: #{transform_wave.1} parent=19 // pred_region
        %s229 = sadd.s32 %s19, %s20
        %s230 = sadd.s32 %s229, 1
        %s231 = smul.u32 %s230, 3
        %p232 = scmp.lt.s32.totalorder %s231, 6
        %s233 = scalar_select %p232, %s231, 6
        %s234 = smul.addr %s233, 8
        %s235 = scalar_lea.vmem %s1, %s234
        %s236 = sadd.s32 %s19, %s20
        %s237 = sadd.s32 %s236, 1
        %s238 = smul.u32 %s237, 3
      $region28: #{transform_wave.1} parent=19 // pred_fallthru
        _
    $region20: #{transform_wave.1} parent=5 // pred_fallthru
      _
    %p239 = scmp.le.s32.totalorder 1, %s12
    %p240 = scmp.lt.s32.totalorder %s12, 3
    %p241 = pnand %p239, %p240
    %p242 = pneg %p241
    // Predicated region
    $region29: #{transform_wave.1} parent=5 // pred_check
      _
    $region30: #{transform_wave.1} parent=5 // pred_check_branch
      %244 = sbr.rel (%p241) target = $region32
    $region31: #{transform_wave.1} parent=5 // pred_region
      %s245 = ssub.s32 %s12, 1
      %s246 = sadd.s32 %s21, %s22
      %s247 = smul.u32 3, %s246
      %s248 = ssub.s32 7, %s247
      %p249 = scmp.lt.s32.totalorder %s248, 3
      %s250 = scalar_select %p249, %s248, 3
      %s251 = smul.u32 128, %s250
      %p252 = scmp.lt.s32.totalorder %s247, 6
      %s253 = scalar_select %p252, %s247, 6
      %s254 = smul.addr %s253, 8
      %s255 = scalar_lea.vmem %s0, %s254
      %p256 = pneg %p52
      %p257 = pneg %p49
      %s258 = sadd.s32 %s21, %s22
      %s259 = sadd.s32 %s258, 1
      %s260 = smul.u32 %s259, 3
      %p261 = scmp.lt.s32.totalorder %s260, 6
      %s262 = scalar_select %p261, %s260, 6
      %s263 = smul.addr %s262, 8
      %s264 = scalar_lea.vmem %s1, %s263
      %p265 = pneg %p84
      %p266 = pneg %p81
      %p267 = pneg %p105
      %p268 = pneg %p102
      %p269 = pneg %p133
      %p270 = pneg %p130
      %s271 = sadd.s32 %s21, %s22
      %s272 = smul.u32 3, %s271
      %p273 = scmp.lt.s32.totalorder %s272, 5
      %s274 = scalar_select %p273, %s272, 5
      %s275 = smul.addr %s274, 8
      %s276 = scalar_lea.vmem %s3, %s275
      %p277 = pneg %p159
      %p278 = pneg %p156
      %p279 = scmp.lt.s32.totalorder %s21, 1
      %s280 = scalar_select %p279, %s21, 1
      %s281 = smul.addr %s280, 8
      %s282 = scalar_lea.vmem %s4, %s281
      %p283 = pneg %p185
      %p284 = pneg %p182
      %p285 = scmp.lt.s32.totalorder %s21, 1
      %s286 = scalar_select %p285, %s21, 1
      %s287 = smul.addr %s286, 8
      %s288 = scalar_lea.vmem %s5, %s287
      %s289 = sadd.s32 %s21, %s22
      %s290 = smul.u32 3, %s289
      %s291 = ssub.s32 7, %s290
      %p292 = scmp.lt.s32.totalorder %s291, 3
      %s293 = scalar_select %p292, %s291, 3
      %s294 = smul.u32 128, %s293
      %p295 = scmp.lt.s32.totalorder %s290, 6
      %s296 = scalar_select %p295, %s290, 6
      %s297 = smul.addr %s296, 8
      %s298 = scalar_lea.vmem %s0, %s297
      %s299 = sadd.s32 %s21, %s22
      %s300 = smul.u32 3, %s299
      %s301 = ssub.s32 7, %s300
      %p302 = scmp.lt.s32.totalorder %s301, 3
      %s303 = scalar_select %p302, %s301, 3
      %s304 = smul.u32 128, %s303
      %s305 = sadd.s32 %s21, %s22
      %s306 = sadd.s32 %s305, 1
      %s307 = smul.u32 %s306, 3
      %p308 = scmp.lt.s32.totalorder %s307, 6
      %s309 = scalar_select %p308, %s307, 6
      %s310 = smul.addr %s309, 8
      %s311 = scalar_lea.vmem %s1, %s310
      %s312 = sadd.s32 %s21, %s22
      %s313 = sadd.s32 %s312, 1
      %s314 = smul.u32 %s313, 3
      %s315 = sadd.s32 %s21, %s22
      %s316 = smul.u32 3, %s315
      %p317 = scmp.lt.s32.totalorder %s316, 5
      %s318 = scalar_select %p317, %s316, 5
      %s319 = smul.addr %s318, 8
      %s320 = scalar_lea.vmem %s3, %s319
      %s321 = sadd.s32 %s21, %s22
      %s322 = smul.u32 3, %s321
      %p323 = scmp.lt.s32.totalorder %s21, 1
      %s324 = scalar_select %p323, %s21, 1
      %s325 = smul.addr %s324, 8
      %s326 = scalar_lea.vmem %s4, %s325
      %p327 = scmp.lt.s32.totalorder %s21, 1
      %s328 = scalar_select %p327, %s21, 1
      %s329 = smul.addr %s328, 8
      %s330 = scalar_lea.vmem %s5, %s329
      %p332 = scmp.eq.s32.totalorder %s22, 0
      // Predicated region
      $region33: #{transform_wave.1} parent=31 // pred_check
        %p333 = pneg %p332
      $region34: #{transform_wave.1} parent=31 // pred_check_branch
        %335 = sbr.rel (%p333) target = $region36
      $region35: #{transform_wave.1} parent=31 // pred_region
        %336 = vst [vmem:[%s326] sm:$0xff] 0.0
        %337 = vst [vmem:[%s330] sm:$0xff] 0.0
      $region36: #{transform_wave.1} parent=31 // pred_fallthru
        _
      %v338 = vld [vmem:[%s298] sm:$0xff]
      %v339 = vld [vmem:[%s298 + $0x8] sm:$0xff]
      %v340 = vld [vmem:[%s298 + $0x10] sm:$0xff]
      %v341 = vld [vmem:[%s311] sm:$0xff]
      %vm346 = vcmask 1046528
      %v347 = vrot.slane %v338, 1
      %v348 = vrot.slane %v339, 1
      %v349 = vsel %vm346, %v347, %v348
      %v350 = vrot.slane %v340, 1
      %v351 = vsel %vm346, %v348, %v350
      %v352 = vrot.slane %v341, 1
      %v353 = vsel %vm346, %v350, %v352
      %354 = vrot.lane.b32.xlu0 %v349, 64
      %v355 = vpop.permute.xlu0 %354
      %356 = vrot.lane.b32.xlu0 %v351, 64
      %v357 = vpop.permute.xlu0 %356
      %358 = vrot.lane.b32.xlu0 %v353, 64
      %v359 = vpop.permute.xlu0 %358
      %vm363 = vcmask 523264
      %v364 = vsel %vm363, %v338, %v355
      %v365 = vsel %vm363, %v339, %v357
      %v366 = vsel %vm363, %v340, %v359
      %v367 = vpack.c.bf16 %v365, %v364
      %v368 = vpack.c.bf16 %v366, %v366
      %369 = vrot.lane.b32.xlu0 %v338, 96
      %v370 = vpop.permute.xlu0 %369
      %371 = vrot.lane.b32.xlu0 %v339, 96
      %v372 = vpop.permute.xlu0 %371
      %373 = vrot.lane.b32.xlu0 %v340, 96
      %v374 = vpop.permute.xlu0 %373
      %378 = vrot.lane.b32.xlu0 %v349, 32
      %v379 = vpop.permute.xlu0 %378
      %380 = vrot.lane.b32.xlu0 %v351, 32
      %v381 = vpop.permute.xlu0 %380
      %382 = vrot.lane.b32.xlu0 %v353, 32
      %v383 = vpop.permute.xlu0 %382
      %vm387 = vcmask 1045504
      %v388 = vrot.slane %v338, 2
      %v389 = vrot.slane %v339, 2
      %v390 = vsel %vm387, %v388, %v389
      %v391 = vrot.slane %v340, 2
      %v392 = vsel %vm387, %v389, %v391
      %v393 = vrot.slane %v341, 2
      %v394 = vsel %vm387, %v391, %v393
      %395 = vrot.lane.b32.xlu0 %v390, 96
      %v396 = vpop.permute.xlu0 %395
      %397 = vrot.lane.b32.xlu0 %v392, 96
      %v398 = vpop.permute.xlu0 %397
      %399 = vrot.lane.b32.xlu0 %v394, 96
      %v400 = vpop.permute.xlu0 %399
      %vm404 = vcmask 261120
      %v405 = vsel %vm404, %v370, %v379
      %v406 = vsel %vm404, %v372, %v381
      %v407 = vsel %vm404, %v374, %v383
      %vm408 = vcmask 785408
      %v409 = vsel %vm408, %v405, %v396
      %v410 = vsel %vm408, %v406, %v398
      %v411 = vsel %vm408, %v407, %v400
      %v412 = vpack.c.bf16 %v410, %v409
      %v413 = vpack.c.bf16 %v411, %v411
      %v414 = vld [vmem:[%s2] sm:$0xf]
      %v415 = vld [vmem:[%s2 + $0x4] sm:$0xf]
      %v416 = vld [vmem:[%s2 + $0x8] sm:$0xf]
      %v417 = vld [vmem:[%s2 + $0xc] sm:$0xf]
      %v418 = vld [vmem:[%s2 + $0x10] sm:$0xf]
      %v419 = vld [vmem:[%s2 + $0x14] sm:$0xf]
      %v420 = vld [vmem:[%s2 + $0x18] sm:$0xf]
      %v421 = vld [vmem:[%s2 + $0x1c] sm:$0xf]
      %v422 = vld [vmem:[%s2 + $0x20] sm:$0xf]
      %v423 = vld [vmem:[%s2 + $0x24] sm:$0xf]
      %v424 = vld [vmem:[%s2 + $0x28] sm:$0xf]
      %v425 = vld [vmem:[%s2 + $0x2c] sm:$0xf]
      %v426 = vld [vmem:[%s2 + $0x30] sm:$0xf]
      %v427 = vld [vmem:[%s2 + $0x34] sm:$0xf]
      %v428 = vld [vmem:[%s2 + $0x38] sm:$0xf]
      %v429 = vld [vmem:[%s2 + $0x3c] sm:$0xf]
      %v446 = vunpack.c.l.b16 %v414
      %v447 = vunpack.c.l.b16 %v415
      %v448 = vunpack.c.l.b16 %v416
      %v449 = vunpack.c.l.b16 %v417
      %v450 = vunpack.c.l.b16 %v418
      %v451 = vunpack.c.l.b16 %v419
      %v452 = vunpack.c.l.b16 %v420
      %v453 = vunpack.c.l.b16 %v421
      %v454 = vunpack.c.l.b16 %v422
      %v455 = vunpack.c.l.b16 %v423
      %v456 = vunpack.c.l.b16 %v424
      %v457 = vunpack.c.l.b16 %v425
      %v458 = vunpack.c.l.b16 %v426
      %v459 = vunpack.c.l.b16 %v427
      %v460 = vunpack.c.l.b16 %v428
      %v461 = vunpack.c.l.b16 %v429
      %v462 = vpack.c.b16 %v447, %v446
      %v463 = vpack.c.b16 %v449, %v448
      %v464 = vpack.c.b16 %v451, %v450
      %v465 = vpack.c.b16 %v453, %v452
      %v466 = vpack.c.b16 %v455, %v454
      %v467 = vpack.c.b16 %v457, %v456
      %v468 = vpack.c.b16 %v459, %v458
      %v469 = vpack.c.b16 %v461, %v460
      %478 = vmatprep.subr.bf16.mxu0 0
      %479 = vmatpush1.bf16.msra.mxu0 %v462
      %480 = vmatprep.subr.bf16.mxu0 0
      %481 = vmatpush1.bf16.msra.mxu0 %v463
      %482 = vmatprep.subr.bf16.mxu0 0
      %483 = vmatpush1.bf16.msra.mxu0 %v464
      %484 = vmatprep.subr.bf16.mxu0 0
      %485 = vmatpush1.bf16.msra.mxu0 %v465
      %486 = vmatprep.subr.bf16.mxu0 0
      %487 = vmatpush1.bf16.msra.mxu0 %v466
      %488 = vmatprep.subr.bf16.mxu0 0
      %489 = vmatpush1.bf16.msra.mxu0 %v467
      %490 = vmatprep.subr.bf16.mxu0 0
      %491 = vmatpush1.bf16.msra.mxu0 %v468
      %492 = vmatprep.subr.bf16.mxu0 0
      %493 = vmatpush1.bf16.msra.mxu0 %v469
      %494 = vmatprep.subr.bf16.mxu0 0
      %495 = vmatpush1.bf16.msra.mxu0 0
      %496 = vmatprep.subr.bf16.mxu0 0
      %497 = vmatpush1.bf16.msra.mxu0 0
      %498 = vmatprep.subr.bf16.mxu0 0
      %499 = vmatpush1.bf16.msra.mxu0 0
      %500 = vmatprep.subr.bf16.mxu0 0
      %501 = vmatpush1.bf16.msra.mxu0 0
      %502 = vmatprep.subr.bf16.mxu0 0
      %503 = vmatpush1.bf16.msra.mxu0 0
      %504 = vmatprep.subr.bf16.mxu0 0
      %505 = vmatpush1.bf16.msra.mxu0 0
      %506 = vmatprep.subr.bf16.mxu0 0
      %507 = vmatpush1.bf16.msra.mxu0 0
      %508 = vmatprep.subr.bf16.mxu0 0
      %509 = vmatpush1.bf16.msra.mxu0 0
      %510 = vmatprep.mubr.bf16.mxu0 0
      %511 = vmatmul.mubr.bf16.gmra.mrb[0].mxu0 %v367
      %v512 = vpop.f32.mrb[0].mxu0
      %v513 = vadd.f32 0.0, %v512
      %v514 = vpop.f32.mrb[0].mxu0
      %v515 = vpop.f32.mrb[0].mxu0
      %v516 = vadd.f32 0.0, %v515
      %v517 = vpop.f32.mrb[0].mxu0
      %518 = vmatprep.mubr.bf16.mxu0 0
      %519 = vmatmul.mubr.bf16.gmra.mrb[0].mxu0 %v368
      %v520 = vpop.f32.mrb[0].mxu0
      %v521 = vadd.f32 0.0, %v520
      %v522 = vpop.f32.mrb[0].mxu0
      %v523 = vpop.f32.mrb[0].mxu0
      %v524 = vpop.f32.mrb[0].mxu0
      %525 = vdwg.mxu0
      %526 = vmatprep.subr.bf16.mxu0 0
      %527 = vmatpush1.bf16.msra.mxu0 %v462
      %528 = vmatprep.subr.bf16.mxu0 0
      %529 = vmatpush1.bf16.msra.mxu0 %v463
      %530 = vmatprep.subr.bf16.mxu0 0
      %531 = vmatpush1.bf16.msra.mxu0 %v464
      %532 = vmatprep.subr.bf16.mxu0 0
      %533 = vmatpush1.bf16.msra.mxu0 %v465
      %534 = vmatprep.subr.bf16.mxu0 0
      %535 = vmatpush1.bf16.msra.mxu0 %v466
      %536 = vmatprep.subr.bf16.mxu0 0
      %537 = vmatpush1.bf16.msra.mxu0 %v467
      %538 = vmatprep.subr.bf16.mxu0 0
      %539 = vmatpush1.bf16.msra.mxu0 %v468
      %540 = vmatprep.subr.bf16.mxu0 0
      %541 = vmatpush1.bf16.msra.mxu0 %v469
      %542 = vmatprep.subr.bf16.mxu0 0
      %543 = vmatpush1.bf16.msra.mxu0 0
      %544 = vmatprep.subr.bf16.mxu0 0
      %545 = vmatpush1.bf16.msra.mxu0 0
      %546 = vmatprep.subr.bf16.mxu0 0
      %547 = vmatpush1.bf16.msra.mxu0 0
      %548 = vmatprep.subr.bf16.mxu0 0
      %549 = vmatpush1.bf16.msra.mxu0 0
      %550 = vmatprep.subr.bf16.mxu0 0
      %551 = vmatpush1.bf16.msra.mxu0 0
      %552 = vmatprep.subr.bf16.mxu0 0
      %553 = vmatpush1.bf16.msra.mxu0 0
      %554 = vmatprep.subr.bf16.mxu0 0
      %555 = vmatpush1.bf16.msra.mxu0 0
      %556 = vmatprep.subr.bf16.mxu0 0
      %557 = vmatpush1.bf16.msra.mxu0 0
      %558 = vmatprep.mubr.bf16.mxu0 0
      %559 = vmatmul.mubr.bf16.gmra.mrb[0].mxu0 %v412
      %v560 = vpop.f32.mrb[0].mxu0
      %v561 = vadd.f32 0.0, %v560
      %v562 = vpop.f32.mrb[0].mxu0
      %v563 = vpop.f32.mrb[0].mxu0
      %v564 = vadd.f32 0.0, %v563
      %v565 = vpop.f32.mrb[0].mxu0
      %566 = vmatprep.mubr.bf16.mxu0 0
      %567 = vmatmul.mubr.bf16.gmra.mrb[0].mxu0 %v413
      %v568 = vpop.f32.mrb[0].mxu0
      %v569 = vadd.f32 0.0, %v568
      %v570 = vpop.f32.mrb[0].mxu0
      %v571 = vpop.f32.mrb[0].mxu0
      %v572 = vpop.f32.mrb[0].mxu0
      %573 = vdwg.mxu0
      %v574 = vmul.f32 %v513, %v513
      %v575 = vmul.f32 %v516, %v516
      %v576 = vmul.f32 %v521, %v521
      %577 = vrot.lane.b32.xlu0 %v574, 64
      %v578 = vpop.permute.xlu0 %577
      %579 = vrot.lane.b32.xlu0 %v575, 64
      %v580 = vpop.permute.xlu0 %579
      %581 = vrot.lane.b32.xlu0 %v576, 64
      %v582 = vpop.permute.xlu0 %581
      %v583 = vadd.f32 %v574, %v578
      %v584 = vadd.f32 %v575, %v580
      %v585 = vadd.f32 %v576, %v582
      %v586 = vmul.f32 %v561, %v561
      %v587 = vmul.f32 %v564, %v564
      %v588 = vmul.f32 %v569, %v569
      %589 = vrot.lane.b32.xlu0 %v586, 64
      %v590 = vpop.permute.xlu0 %589
      %591 = vrot.lane.b32.xlu0 %v587, 64
      %v592 = vpop.permute.xlu0 %591
      %593 = vrot.lane.b32.xlu0 %v588, 64
      %v594 = vpop.permute.xlu0 %593
      %v595 = vadd.f32 %v586, %v590
      %v596 = vadd.f32 %v587, %v592
      %v597 = vadd.f32 %v588, %v594
      %v598 = vlaneseq
      %v599 = vand.u32 %v598, 127
      %vm600 = vcmp.lt.s32.totalorder %v599, 64
      %v601 = vsel %vm600, %v583, %v595
      %v602 = vsel %vm600, %v584, %v596
      %v603 = vsel %vm600, %v585, %v597
      %604 = vst [vmem:[%s320] sm:$0xff] %v601
      %605 = vst [vmem:[%s320 + $0x8] sm:$0xff] %v602
      %606 = vst [vmem:[%s320 + $0x10] sm:$0xff] %v603
      %s607 = sadd.s32 %s21, %s22
      %v608 = vlaneseq
      %v609 = vshrl.u32 %v608, 7
      %v610 = vadd.s32 %v609, 8
      %v611 = vadd.s32 %v609, 16
      %s612 = smul.u32 %s607, 48
      %v613 = vmul.u32 %v609, 2
      %v614 = vmul.u32 %v610, 2
      %v615 = vmul.u32 %v611, 2
      %v616 = vstv %s612
      %v617 = vadd.s32 %v616, %v613
      %v618 = vadd.s32 %v616, %v614
      %v619 = vadd.s32 %v616, %v615
      %vm620 = vcmp.ge.s32.totalorder %v599, 64
      %v621 = vsel %vm620, 1, 0
      %v622 = vadd.s32 %v617, %v621
      %v623 = vadd.s32 %v618, %v621
      %v624 = vadd.s32 %v619, %v621
      %vm625 = vcmp.lt.s32.totalorder %v622, 33
      %vm626 = vcmp.lt.s32.totalorder %v623, 33
      %vm627 = vcmp.lt.s32.totalorder %v624, 33
      %v628 = vsel %vm625, %v601, 0.0
      %v629 = vsel %vm626, %v602, 0.0
      %v630 = vsel %vm627, %v603, 0.0
      %v631 = vld [vmem:[%s326] sm:$0x1]
      %v632 = vadd.f32 %v628, %v629
      %v633 = vadd.f32 %v632, %v630
      %v634 = vrot.slane %v633, 4
      %v635 = vadd.f32 %v633, %v634
      %v636 = vrot.slane %v635, 2
      %v637 = vadd.f32 %v635, %v636
      %v638 = vrot.slane %v637, 1
      %v639 = vadd.f32 %v637, %v638
      %v640 = vadd.f32 %v631, %v639
      %641 = vst [vmem:[%s326] sm:$0x1] %v640
      %v642 = vld [vmem:[%s330] sm:$0x1]
      %v643 = vmul.f32 %v628, %v628
      %v644 = vmul.f32 %v629, %v629
      %v645 = vmul.f32 %v630, %v630
      %v646 = vadd.f32 %v643, %v644
      %v647 = vadd.f32 %v646, %v645
      %v648 = vrot.slane %v647, 4
      %v649 = vadd.f32 %v647, %v648
      %v650 = vrot.slane %v649, 2
      %v651 = vadd.f32 %v649, %v650
      %v652 = vrot.slane %v651, 1
      %v653 = vadd.f32 %v651, %v652
      %v654 = vadd.f32 %v642, %v653
      %655 = vst [vmem:[%s330] sm:$0x1] %v654
      %s656 = sadd.s32 %s21, %s22
      %s657 = smul.u32 3, %s656
      %p658 = scmp.lt.s32.totalorder %s657, 5
      %s659 = scalar_select %p658, %s657, 5
      %s660 = smul.addr %s659, 8
      %s661 = scalar_lea.vmem %s3, %s660
      %p662 = scmp.lt.s32.totalorder %s21, 1
      %s663 = scalar_select %p662, %s21, 1
      %s664 = smul.addr %s663, 8
      %s665 = scalar_lea.vmem %s4, %s664
      %p666 = scmp.lt.s32.totalorder %s21, 1
      %s667 = scalar_select %p666, %s21, 1
      %s668 = smul.addr %s667, 8
      %s669 = scalar_lea.vmem %s5, %s668
      // Predicated region
      $region37: #{transform_wave.1} parent=31 // pred_check
        %p670 = pneg %p130
      $region38: #{transform_wave.1} parent=31 // pred_check_branch
        %672 = sbr.rel (%p670) target = $region40
      $region39: #{transform_wave.1} parent=31 // pred_region
        %s673 = sadd.s32 %s21, %s22
        %s674 = smul.u32 3, %s673
      $region40: #{transform_wave.1} parent=31 // pred_fallthru
        _
      // Predicated region
      $region41: #{transform_wave.1} parent=31 // pred_check
        %p675 = pneg %p156
      $region42: #{transform_wave.1} parent=31 // pred_check_branch
        %677 = sbr.rel (%p675) target = $region44
      $region43: #{transform_wave.1} parent=31 // pred_region
        _
      $region44: #{transform_wave.1} parent=31 // pred_fallthru
        _
      // Predicated region
      $region45: #{transform_wave.1} parent=31 // pred_check
        %p678 = pneg %p182
      $region46: #{transform_wave.1} parent=31 // pred_check_branch
        %680 = sbr.rel (%p678) target = $region48
      $region47: #{transform_wave.1} parent=31 // pred_region
        _
      $region48: #{transform_wave.1} parent=31 // pred_fallthru
        _
    $region32: #{transform_wave.1} parent=5 // pred_fallthru
      _
    %p681 = scmp.le.s32.totalorder 2, %s12
    // Predicated region
    $region49: #{transform_wave.1} parent=5 // pred_check
      %p682 = pneg %p681
    $region50: #{transform_wave.1} parent=5 // pred_check_branch
      %684 = sbr.rel (%p682) target = $region52
    $region51: #{transform_wave.1} parent=5 // pred_region
      %s685 = ssub.s32 %s12, 2
      // Predicated region
      $region53: #{transform_wave.1} parent=51 // pred_check
        %p686 = pneg %p136
      $region54: #{transform_wave.1} parent=51 // pred_check_branch
        %688 = sbr.rel (%p686) target = $region56
      $region55: #{transform_wave.1} parent=51 // pred_region
        %s689 = sadd.s32 %s23, %s24
        %s690 = smul.u32 3, %s689
        %p691 = scmp.lt.s32.totalorder %s690, 5
        %s692 = scalar_select %p691, %s690, 5
        %s693 = smul.addr %s692, 8
        %s694 = scalar_lea.vmem %s3, %s693
      $region56: #{transform_wave.1} parent=51 // pred_fallthru
        _
      // Predicated region
      $region57: #{transform_wave.1} parent=51 // pred_check
        %p695 = pneg %p162
      $region58: #{transform_wave.1} parent=51 // pred_check_branch
        %697 = sbr.rel (%p695) target = $region60
      $region59: #{transform_wave.1} parent=51 // pred_region
        %p698 = scmp.lt.s32.totalorder %s23, 1
        %s699 = scalar_select %p698, %s23, 1
        %s700 = smul.addr %s699, 8
        %s701 = scalar_lea.vmem %s4, %s700
      $region60: #{transform_wave.1} parent=51 // pred_fallthru
        _
      // Predicated region
      $region61: #{transform_wave.1} parent=51 // pred_check
        %p702 = pneg %p188
      $region62: #{transform_wave.1} parent=51 // pred_check_branch
        %704 = sbr.rel (%p702) target = $region64
      $region63: #{transform_wave.1} parent=51 // pred_region
        %p705 = scmp.lt.s32.totalorder %s23, 1
        %s706 = scalar_select %p705, %s23, 1
        %s707 = smul.addr %s706, 8
        %s708 = scalar_lea.vmem %s5, %s707
      $region64: #{transform_wave.1} parent=51 // pred_fallthru
        _
    $region52: #{transform_wave.1} parent=5 // pred_fallthru
      _
  $region6: #{transform_wave.1} parent=0 // loop_footer
    %s16 = sadd.s32 1, %s12
  $region7: #{transform_wave.1} parent=0 // loop_footer_branch
    %11 = sbr.rel target = $region3
  $region8: #{transform_wave.1} parent=0 // loop_exit
    _

</llo_original>
